<compile_context>
chip_gen: v7x
topology: tpu7x:2x2x1
jax: 0.10.0
libtpu: 0.0.40
codegen_flags: <defaults>
</compile_context>

<pallas_src>
import jax
import jax.numpy as jnp
import numpy as np
from jax.experimental import pallas as pl
from jax.experimental.pallas import tpu as pltpu


def _chunk_sizes(dim_size, chunks):
    """torch.chunk split sizes: each chunk is ceil(dim/chunks); last may be smaller."""
    per = -(-dim_size // chunks)  # ceil
    sizes = []
    remaining = dim_size
    while remaining > 0:
        s = min(per, remaining)
        sizes.append(s)
        remaining -= s
    return sizes


def _sublane_align(dtype):
    bits = jnp.dtype(dtype).itemsize * 8
    return 8 * max(1, 32 // bits)  # 8 for f32, 16 for bf16, 32 for int8/fp8


def _make_chunk_kernel(col_bounds):
    def kernel(x_ref, *o_refs):
        # one row tile of the flattened slab -> static column-band copies, one per chunk
        for (lo, hi), o_ref in zip(col_bounds, o_refs):
            o_ref[...] = x_ref[:, lo:hi]
    return kernel


def chunk_forward(x, chunk_size):
    """Pallas equivalent of Chunk(chunk_size)(x) == x.chunk(chunk_size, dim=1)."""
    assert x.ndim >= 2, "chunk along dim=1 requires ndim >= 2"
    d0, d1 = int(x.shape[0]), int(x.shape[1])
    rest_shape = tuple(int(d) for d in x.shape[2:])
    rest = int(np.prod(rest_shape)) if rest_shape else 1
    total_w = d1 * rest
    itemsize = jnp.dtype(x.dtype).itemsize

    sizes = _chunk_sizes(d1, int(chunk_size))
    bounds = []
    off = 0
    for s in sizes:
        bounds.append((off * rest, (off + s) * rest))
        off += s

    # Free metadata reshape: each chunk is a contiguous column band of this slab.
    x2 = x.reshape(d0, total_w)

    # Dtype-aware row tiling.  Keep (input + all outputs), double-buffered
    # (~4 * tile_b * total_w * itemsize) under a conservative 16 MiB budget so the
    # same tiling is safe on v5e/v6e (128 MiB VMEM) and v7x (64 MiB per TC).
    align = _sublane_align(x.dtype)
    budget = 16 * 1024 * 1024
    if d0 % align == 0:
        max_rows = max(align, (budget // (4 * total_w * itemsize)) // align * align)
        tile_b = min(d0, max_rows)
    else:
        # Full-extent row block (legal even when misaligned); avoids pad/concat
        # HBM traffic.  Typical leading dims here are small.
        tile_b = d0

    grid = (pl.cdiv(d0, tile_b),)

    out_shapes = tuple(
        jax.ShapeDtypeStruct((d0, hi - lo), x.dtype) for lo, hi in bounds
    )
    out_specs = tuple(
        pl.BlockSpec((tile_b, hi - lo), lambda r: (r, 0)) for lo, hi in bounds
    )

    vmem_need = 4 * tile_b * total_w * itemsize
    vmem_limit = int(min(48 * 2**20, max(16 * 2**20, 2 * vmem_need)))

    outs = pl.pallas_call(
        _make_chunk_kernel(bounds),
        out_shape=out_shapes,
        grid_spec=pltpu.PrefetchScalarGridSpec(
            num_scalar_prefetch=0,
            grid=grid,
            in_specs=[pl.BlockSpec((tile_b, total_w), lambda r: (r, 0))],
            out_specs=out_specs,
        ),
        compiler_params=pltpu.CompilerParams(
            dimension_semantics=("parallel",),  # row axis shards across TCs on v7x when >1 step
            vmem_limit_bytes=vmem_limit,
        ),
        cost_estimate=pl.CostEstimate(
            flops=0,
            transcendentals=0,
            bytes_accessed=2 * d0 * total_w * itemsize,
        ),
    )(x2)

    # Free metadata reshapes back to (d0, size_i, *rest_shape).
    return tuple(o.reshape(d0, s, *rest_shape) for o, s in zip(outs, sizes))


if __name__ == "__main__":
    # Typical cifar_vae usage: split channel maps, e.g. mu/logvar halves.
    # Small shapes: batch=2, channels=4, spatial=16x16, chunk_size=2.
    chunk_size = 2
    key = jax.random.PRNGKey(0)
    x = jax.random.normal(key, (2, 4, 16, 16), dtype=jnp.float32)

    outs = chunk_forward(x, chunk_size)
    outs = jax.block_until_ready(outs)

    # Reference == torch x.chunk(2, dim=1) semantics.
    refs = (x[:, :2], x[:, 2:])
    assert len(outs) == len(refs), (len(outs), len(refs))
    for o, r in zip(outs, refs):
        assert o.shape == r.shape, (o.shape, r.shape)
        np.testing.assert_array_equal(np.asarray(o), np.asarray(r))

    print("KERNEL_OK")
</pallas_src>

<mosaic_0001>
module attributes {stable_mosaic.version = 11 : i64} {
  func.func @kernel(%arg0: i32, %arg1: memref<2x1024xf32, #tpu.memory_space<vmem>>, %arg2: memref<2x512xf32, #tpu.memory_space<vmem>>, %arg3: memref<2x512xf32, #tpu.memory_space<vmem>>) attributes {dimension_semantics = [#tpu.dimension_semantics<parallel>], iteration_bounds = array<i64: 1>, scalar_prefetch = 0 : i64, scratch_operands = 0 : i64, tpu.core_type = #tpu.core_type<tc>, window_params = [{transform_indices = @transform_0, window_bounds = array<i64: 2, 1024>}, {transform_indices = @transform_1, window_bounds = array<i64: 2, 512>}, {transform_indices = @transform_2, window_bounds = array<i64: 2, 512>}]} {
    %c0 = arith.constant 0 : index
    %c0_0 = arith.constant 0 : index
    %0 = vector.load %arg1[%c0, %c0_0] : memref<2x1024xf32, #tpu.memory_space<vmem>>, vector<2x512xf32>
    %c0_1 = arith.constant 0 : index
    %c0_2 = arith.constant 0 : index
    %1 = vector.load %arg2[%c0_1, %c0_2] : memref<2x512xf32, #tpu.memory_space<vmem>>, vector<2x512xf32>
    tpu.vector_store %arg2[%c0_1, %c0_2], %0 {strides = array<i32>} : memref<2x512xf32, #tpu.memory_space<vmem>>, vector<2x512xf32>,
    %c0_3 = arith.constant 0 : index
    %c512 = arith.constant 512 : index
    %2 = vector.load %arg1[%c0_3, %c512] : memref<2x1024xf32, #tpu.memory_space<vmem>>, vector<2x512xf32>
    %c0_4 = arith.constant 0 : index
    %c0_5 = arith.constant 0 : index
    %3 = vector.load %arg3[%c0_4, %c0_5] : memref<2x512xf32, #tpu.memory_space<vmem>>, vector<2x512xf32>
    tpu.vector_store %arg3[%c0_4, %c0_5], %2 {strides = array<i32>} : memref<2x512xf32, #tpu.memory_space<vmem>>, vector<2x512xf32>,
    return
  }
  func.func @transform_0(%arg0: i32) -> (i32, i32) {
    %c0_i32 = arith.constant 0 : i32
    %c0_i32_0 = arith.constant 0 : i32
    return %arg0, %c0_i32 : i32, i32
  }
  func.func @transform_1(%arg0: i32) -> (i32, i32) {
    %c0_i32 = arith.constant 0 : i32
    %c0_i32_0 = arith.constant 0 : i32
    return %arg0, %c0_i32 : i32, i32
  }
  func.func @transform_2(%arg0: i32) -> (i32, i32) {
    %c0_i32 = arith.constant 0 : i32
    %c0_i32_0 = arith.constant 0 : i32
    return %arg0, %c0_i32 : i32, i32
  }
}

</mosaic_0001>

<llo_original>
// kernel: tpu_custom_call.1
$region0: #{tpu_custom_call.1}
  #allocation0 [shape = 'u32[]', space=smem, size = 0x4, offset = 0x4, fixed_abs, tag = 'smem constant byte address 0x4 - core index']
  #allocation1 [shape = 'u32[144,128]{1,0:T(1,128)}', space=vmem, size = 0x12000, scoped, tag = 'internal scratch']
  %s0 = inlined_call_operand.hbm [shape: f32[2,1024], index: 0, kind: input, shape index: {}]
  %s1 = inlined_call_operand.hbm [shape: f32[2,512], index: 1, kind: output, shape index: {0}]
  %s2 = inlined_call_operand.hbm [shape: f32[2,512], index: 2, kind: output, shape index: {1}]
  %3 = xla_tuple %s1, %s2
  %s4 = sld [smem:[#allocation0]]
  $region26: #{tpu_custom_call.1} parent=0
    _
  %s6 = ssub.s32 1, %s4
  %s7 = scalar_select 0, %s6, %s4
  $region1: #{tpu_custom_call.1} parent=0
    #allocation2 [shape = 'u8[8192]{0}', space=vmem, size = 0x2000, scoped, tag = 'input window, operand 0, single buffered']
    #allocation3 [shape = 's32[1]{0}', space=sflag, size = 0x4, scoped, tag = 'scoped memory for tpu_custom_call.1']
    #allocation4 [shape = 's32[1]{0}', space=sflag, size = 0x4, scoped, tag = 'scoped memory for tpu_custom_call.1']
    #allocation5 [shape = 'u8[4096]{0}', space=vmem, size = 0x1000, scoped, tag = 'output window, operand 0, single buffered']
    #allocation6 [shape = 'u8[4096]{0}', space=vmem, size = 0x1000, scoped, tag = 'output window, operand 1, single buffered']
    #allocation7 [shape = 's32[1]{0}', space=sflag, size = 0x4, scoped, tag = 'scoped memory for tpu_custom_call.1']
    %8 = vsyncpa [#allocation3], 0
    %9 = vsyncpa [#allocation4], 0
    %10 = vsyncpa [#allocation7], 0
    // Predicated region
    $region2: #{tpu_custom_call.1} parent=1 // pred_check
      _
    $region3: #{tpu_custom_call.1} parent=1 // pred_check_branch
      %12 = sbr.rel (0) target = $region5
    $region4: #{tpu_custom_call.1} parent=1 // pred_region
      %s14 = ssub.s32 256, 256
      %15 = vsyncadd [#allocation3], %s14
      %s17 = sshll.u32 [#allocation2], 4
      %s18 = int_to_ptr.vmem [resolvable:$true] %s17
      %20 = dma.hbm_to_vmem [thread:$0]  %s0, 256, %s18, [#allocation3]
    $region5: #{tpu_custom_call.1} parent=1 // pred_fallthru
      _
    // Predicated region
    $region6: #{tpu_custom_call.1} parent=1 // pred_check
      _
    $region7: #{tpu_custom_call.1} parent=1 // pred_check_branch
      %22 = sbr.rel (0) target = $region9
    $region8: #{tpu_custom_call.1} parent=1 // pred_region
      %23 = dma.done [#allocation3], 256
    $region9: #{tpu_custom_call.1} parent=1 // pred_fallthru
      _
    %v24 = vld [vmem:[#allocation2] sm:$0xff]
    %25 = vst [vmem:[#allocation5] sm:$0xff] %v24
    %v26 = vld [vmem:[#allocation2 + $0x8] sm:$0xff]
    %27 = vst [vmem:[#allocation6] sm:$0xff] %v26
    // Predicated region
    $region10: #{tpu_custom_call.1} parent=1 // pred_check
      _
    $region11: #{tpu_custom_call.1} parent=1 // pred_check_branch
      %29 = sbr.rel (0) target = $region13
    $region12: #{tpu_custom_call.1} parent=1 // pred_region
      %s31 = ssub.s32 128, 128
      %32 = vsyncadd [#allocation4], %s31
      %s34 = sshll.u32 [#allocation5], 4
      %s35 = int_to_ptr.vmem [resolvable:$true] %s34
      %37 = dma.vmem_to_hbm [thread:$0]  %s35, 128, %s1, [#allocation4]
    $region13: #{tpu_custom_call.1} parent=1 // pred_fallthru
      _
    // Predicated region
    $region14: #{tpu_custom_call.1} parent=1 // pred_check
      _
    $region15: #{tpu_custom_call.1} parent=1 // pred_check_branch
      %39 = sbr.rel (0) target = $region17
    $region16: #{tpu_custom_call.1} parent=1 // pred_region
      %s41 = ssub.s32 128, 128
      %42 = vsyncadd [#allocation7], %s41
      %s44 = sshll.u32 [#allocation6], 4
      %s45 = int_to_ptr.vmem [resolvable:$true] %s44
      %47 = dma.vmem_to_hbm [thread:$0]  %s45, 128, %s2, [#allocation7]
    $region17: #{tpu_custom_call.1} parent=1 // pred_fallthru
      _
    // Predicated region
    $region18: #{tpu_custom_call.1} parent=1 // pred_check
      _
    $region19: #{tpu_custom_call.1} parent=1 // pred_check_branch
      %49 = sbr.rel (0) target = $region21
    $region20: #{tpu_custom_call.1} parent=1 // pred_region
      %50 = dma.done [#allocation4], 128
    $region21: #{tpu_custom_call.1} parent=1 // pred_fallthru
      _
    // Predicated region
    $region22: #{tpu_custom_call.1} parent=1 // pred_check
      _
    $region23: #{tpu_custom_call.1} parent=1 // pred_check_branch
      %52 = sbr.rel (0) target = $region25
    $region24: #{tpu_custom_call.1} parent=1 // pred_region
      %53 = dma.done [#allocation7], 128
    $region25: #{tpu_custom_call.1} parent=1 // pred_fallthru
      _
    %54 = vsyncpa [#allocation3], 1
    %55 = vsyncpa [#allocation4], 1
    %56 = vsyncpa [#allocation7], 1

</llo_original>
